<compile_context>
chip_gen: v5e
topology: v5e:2x2
jax: 0.10.0
libtpu: 0.0.40
codegen_flags: <defaults>
</compile_context>

<pallas_src>
import functools

import jax
import jax.numpy as jnp
from jax.experimental import pallas as pl
from jax.experimental.pallas import tpu as pltpu  # noqa: F401


def _fused_kernel(a_ref, wgb_ref, o_ref, *, inv_n):
    # a_ref:   (16, 384) f32 — lane-dense im2col A^T; rows 12..15 zero,
    #                          columns 324..383 zero (lane pad to 3x128).
    # wgb_ref: (8, 16)   f32 — cols 0..11 conv weight, 12 gamma, 13 beta,
    #                          14..15 zero.
    wgb = wgb_ref[...]
    a = a_ref[...]

    # conv1 (no bias) on the MXU.  The zero K-pad rows of A^T make the full
    # (8,16)x(16,384) dot identical to the real (8,12)x(12,324) contraction on
    # the valid columns.  HIGHEST precision keeps f32 parity with torch.
    x = jnp.dot(wgb, a, preferred_element_type=jnp.float32,
                precision=jax.lax.Precision.HIGHEST)            # (8, 384)

    # relu1
    x = jnp.maximum(x, 0.0)

    # bn1: BatchNorm2d training-mode batch statistics over N*H*W (N=1, so over
    # the 324 valid lane positions; padded lanes are zero post-ReLU and add
    # nothing to the sums), biased variance, eps=1e-5.  Single pass: sum and
    # sum-of-squares along the lane axis.  inv_n is hard-wired to 1/324.
    s = jnp.sum(x, axis=1, keepdims=True)                       # (8, 1)
    sq = jnp.sum(x * x, axis=1, keepdims=True)                  # (8, 1)
    mean = s * inv_n
    var = sq * inv_n - mean * mean
    inv_std = jax.lax.rsqrt(var + 1e-5)
    gamma = wgb[:, 12:13]                                       # (8, 1)
    beta = wgb[:, 13:14]                                        # (8, 1)
    x = (x - mean) * (inv_std * gamma) + beta

    # F.relu (the following self.relu1 in the torch model is a no-op on this)
    x = jnp.maximum(x, 0.0)

    # CustomModule: x * sigmoid(softplus(x)).  For x >= 0 this equals
    # x * (1 + e^x) / (2 + e^x); clamp the exp argument at torch's softplus
    # threshold (20), where the ratio saturates to ~1 exactly like sigmoid(x).
    # Exact divide (not approx reciprocal) for tight-tolerance parity.
    e = jnp.exp(jnp.minimum(x, 20.0))
    x = x * (1.0 + e) / (2.0 + e)

    # x += 1; lane-dense (OC, HW_pad) unmasked store
    o_ref[...] = x + 1.0


@jax.jit
def model_forward(inputs, conv_w, bn_gamma, bn_beta):
    """inputs: (1, 3, 32, 32) f32 NCHW.  Returns flattened (8*18*18,) f32."""
    N, C, H, W = inputs.shape
    OC, _, KH, KW = conv_w.shape                    # (8, 3, 2, 2)
    stride, pad = 2, 2

    # pad H, W by 2 on each side -> (3, 36, 36)
    xp = jnp.pad(inputs[0], ((0, 0), (pad, pad), (pad, pad)))
    Hp, Wp = H + 2 * pad, W + 2 * pad
    Ho, Wo = (Hp - KH) // stride + 1, (Wp - KW) // stride + 1   # 18, 18
    HW = Ho * Wo                                                # 324
    K = C * KH * KW                                             # 12

    K_pad = 16                                                  # sublane pad
    HW_pad = ((HW + 127) // 128) * 128                          # 384 = 3*128

    # space-to-depth, already transposed (A^T): row (c, kh, kw), col (i, j)
    # (non-overlapping 2x2 windows since stride == kernel); then zero-pad to
    # (16, 384) so both the K and lane axes are full tiles.
    a_t = xp.reshape(C, Ho, KH, Wo, KW)
    a_t = jnp.transpose(a_t, (0, 2, 4, 1, 3)).reshape(K, HW)    # (12, 324)
    a_t = jnp.pad(a_t, ((0, K_pad - K), (0, HW_pad - HW)))      # (16, 384)

    # fuse conv weight + bn gamma/beta into one (8, 16) parameter tile
    w = conv_w.reshape(OC, K)                                   # (8, 12)
    wgb = jnp.concatenate(
        [w,
         bn_gamma.reshape(OC, 1).astype(jnp.float32),
         bn_beta.reshape(OC, 1).astype(jnp.float32),
         jnp.zeros((OC, K_pad - K - 2), jnp.float32)],
        axis=1)                                                 # (8, 16)

    out = pl.pallas_call(
        functools.partial(_fused_kernel, inv_n=1.0 / HW),
        out_shape=jax.ShapeDtypeStruct((OC, HW_pad), jnp.float32),
        in_specs=[
            pl.BlockSpec((K_pad, HW_pad), lambda: (0, 0)),
            pl.BlockSpec((OC, K_pad), lambda: (0, 0)),
        ],
        out_specs=pl.BlockSpec((OC, HW_pad), lambda: (0, 0)),
    )(a_t, wgb)

    # torch.flatten of (1, OC, Ho, Wo) is exactly (OC, Ho*Wo) row-major;
    # drop the lane padding and flatten (fuses into the same jit dispatch).
    return out[:, :HW].reshape(-1)


if __name__ == "__main__":
    key = jax.random.PRNGKey(0)
    k_in, k_w = jax.random.split(key)

    # Model expects input of shape (1, 3, 32, 32)
    x = jax.random.normal(k_in, (1, 3, 32, 32), dtype=jnp.float32)

    # conv1: Conv2d(3, 8, kernel_size=2, stride=2, padding=2, bias=False)
    conv_w = jax.random.normal(k_w, (8, 3, 2, 2), dtype=jnp.float32) * 0.2

    # bn1 params: torch default init gamma=1, beta=0
    bn_gamma = jnp.ones((8,), dtype=jnp.float32)
    bn_beta = jnp.zeros((8,), dtype=jnp.float32)

    y = model_forward(x, conv_w, bn_gamma, bn_beta)
    jax.block_until_ready(y)

    assert y.shape == (8 * 18 * 18,), y.shape
    print("KERNEL_OK")
</pallas_src>

<mosaic_0001>
module attributes {stable_mosaic.version = 11 : i64} {
  func.func @_fused_kernel(%arg0: memref<16x384xf32, #tpu.memory_space<vmem>>, %arg1: memref<8x16xf32, #tpu.memory_space<vmem>>, %arg2: memref<8x384xf32, #tpu.memory_space<vmem>>) attributes {dimension_semantics = [], scalar_prefetch = 0 : i64, scratch_operands = 0 : i64, tpu.core_type = #tpu.core_type<tc>} {
    %c0 = arith.constant 0 : index
    %c0_0 = arith.constant 0 : index
    %0 = vector.load %arg1[%c0, %c0_0] : memref<8x16xf32, #tpu.memory_space<vmem>>, vector<8x16xf32>
    %c0_1 = arith.constant 0 : index
    %c0_2 = arith.constant 0 : index
    %1 = vector.load %arg0[%c0_1, %c0_2] : memref<16x384xf32, #tpu.memory_space<vmem>>, vector<16x384xf32>
    %cst = arith.constant dense<0.000000e+00> : vector<8x384xf32>
    %2 = tpu.matmul %0, %1, %cst {dimension_numbers = #tpu.dot_dimension_numbers<[1], [0], [0], [1], [0, 0, 1, 1], [], []>, precision = #tpu.contract_precision<fp32>} : vector<8x16xf32>, vector<16x384xf32>, vector<8x384xf32> -> vector<8x384xf32>
    %cst_3 = arith.constant 0.000000e+00 : f32
    %3 = vector.broadcast %cst_3 : f32 to vector<8x384xf32>
    %4 = arith.maximumf %2, %3 : vector<8x384xf32>
    %cst_4 = arith.constant dense<0.000000e+00> : vector<8xf32>
    %5 = vector.multi_reduction <add>, %4, %cst_4 [1] : vector<8x384xf32> to vector<8xf32>
    %6 = vector.shape_cast %5 : vector<8xf32> to vector<8x1xf32>
    %7 = arith.mulf %4, %4 : vector<8x384xf32>
    %cst_5 = arith.constant dense<0.000000e+00> : vector<8xf32>
    %8 = vector.multi_reduction <add>, %7, %cst_5 [1] : vector<8x384xf32> to vector<8xf32>
    %9 = vector.shape_cast %8 : vector<8xf32> to vector<8x1xf32>
    %cst_6 = arith.constant 0.00308641978 : f32
    %10 = vector.broadcast %cst_6 : f32 to vector<8x1xf32>
    %11 = arith.mulf %6, %10 : vector<8x1xf32>
    %cst_7 = arith.constant 0.00308641978 : f32
    %12 = vector.broadcast %cst_7 : f32 to vector<8x1xf32>
    %13 = arith.mulf %9, %12 : vector<8x1xf32>
    %14 = arith.mulf %11, %11 : vector<8x1xf32>
    %15 = arith.subf %13, %14 : vector<8x1xf32>
    %cst_8 = arith.constant 9.99999974E-6 : f32
    %16 = vector.broadcast %cst_8 : f32 to vector<8x1xf32>
    %17 = arith.addf %15, %16 : vector<8x1xf32>
    %18 = math.rsqrt %17 : vector<8x1xf32>
    %19 = vector.extract_strided_slice %0 {offsets = [0, 12], sizes = [8, 1], strides = [1, 1]} : vector<8x16xf32> to vector<8x1xf32>
    %20 = vector.extract_strided_slice %0 {offsets = [0, 13], sizes = [8, 1], strides = [1, 1]} : vector<8x16xf32> to vector<8x1xf32>
    %21 = vector.broadcast %11 : vector<8x1xf32> to vector<8x384xf32>
    %22 = arith.subf %4, %21 : vector<8x384xf32>
    %23 = arith.mulf %18, %19 : vector<8x1xf32>
    %24 = vector.broadcast %23 : vector<8x1xf32> to vector<8x384xf32>
    %25 = arith.mulf %22, %24 : vector<8x384xf32>
    %26 = vector.broadcast %20 : vector<8x1xf32> to vector<8x384xf32>
    %27 = arith.addf %25, %26 : vector<8x384xf32>
    %cst_9 = arith.constant 0.000000e+00 : f32
    %28 = vector.broadcast %cst_9 : f32 to vector<8x384xf32>
    %29 = arith.maximumf %27, %28 : vector<8x384xf32>
    %cst_10 = arith.constant 2.000000e+01 : f32
    %30 = vector.broadcast %cst_10 : f32 to vector<8x384xf32>
    %31 = arith.minimumf %29, %30 : vector<8x384xf32>
    %32 = math.exp %31 : vector<8x384xf32>
    %cst_11 = arith.constant 1.000000e+00 : f32
    %33 = vector.broadcast %cst_11 : f32 to vector<8x384xf32>
    %34 = arith.addf %33, %32 : vector<8x384xf32>
    %35 = arith.mulf %29, %34 : vector<8x384xf32>
    %cst_12 = arith.constant 2.000000e+00 : f32
    %36 = vector.broadcast %cst_12 : f32 to vector<8x384xf32>
    %37 = arith.addf %36, %32 : vector<8x384xf32>
    %38 = arith.divf %35, %37 : vector<8x384xf32>
    %cst_13 = arith.constant 1.000000e+00 : f32
    %39 = vector.broadcast %cst_13 : f32 to vector<8x384xf32>
    %40 = arith.addf %38, %39 : vector<8x384xf32>
    %c0_14 = arith.constant 0 : index
    %c0_15 = arith.constant 0 : index
    %41 = vector.load %arg2[%c0_14, %c0_15] : memref<8x384xf32, #tpu.memory_space<vmem>>, vector<8x384xf32>
    tpu.vector_store %arg2[%c0_14, %c0_15], %40 {strides = array<i32>} : memref<8x384xf32, #tpu.memory_space<vmem>>, vector<8x384xf32>,
    return
  }
}

</mosaic_0001>

<llo_original>
// kernel: model_forward.1
$region0: #{model_forward.1}
  #allocation0 [shape = 'u32[]', space=smem, size = 0x4, offset = 0x4, fixed_abs, tag = 'smem constant byte address 0x4 - core index']
  #allocation1 [shape = 'u32[72,128]{1,0:T(1,128)}', space=vmem, size = 0x9000, scoped, tag = 'internal scratch']
  %s0 = inlined_call_operand.vmem [shape: f32[16,384], index: 0, kind: input, shape index: {}]
  %s1 = inlined_call_operand.vmem [shape: f32[8,16], index: 1, kind: input, shape index: {}]
  %s2 = inlined_call_operand.vmem [shape: f32[8,384], index: 2, kind: output, shape index: {}]
  %s3 = sld [smem:[#allocation0]]
  $region18: #{model_forward.1} parent=0
    _
  %s5 = ssub.s32 1, %s3
  %s6 = scalar_select 0, %s5, %s3
  // Predicated region
  $region2: #{model_forward.1} parent=0 // pred_check
    _
  $region3: #{model_forward.1} parent=0 // pred_check_branch
    %8 = sbr.rel (0) target = $region5
  $region4: #{model_forward.1} parent=0 // pred_region
    _
  $region5: #{model_forward.1} parent=0 // pred_fallthru
    _
  // Predicated region
  $region6: #{model_forward.1} parent=0 // pred_check
    _
  $region7: #{model_forward.1} parent=0 // pred_check_branch
    %10 = sbr.rel (0) target = $region9
  $region8: #{model_forward.1} parent=0 // pred_region
    _
  $region9: #{model_forward.1} parent=0 // pred_fallthru
    _
  %v11 = vld [vmem:[%s1] sm:$0xff]
  %v12 = vld [vmem:[%s0] sm:$0xff]
  %v13 = vld [vmem:[%s0 + $0x8] sm:$0xff]
  %v14 = vld [vmem:[%s0 + $0x10] sm:$0xff]
  %v15 = vld [vmem:[%s0 + $0x18] sm:$0xff]
  %v16 = vld [vmem:[%s0 + $0x20] sm:$0xff]
  %v17 = vld [vmem:[%s0 + $0x28] sm:$0xff]
  %vm18 = vcmask 130048
  %v20 = vsel %vm18, %v11, 0
  %22 = vmatpush.msra.mxu0 0.0
  %23 = vmatpush.msra.mxu0 0.0
  %24 = vmatpush.msra.mxu0 0.0
  %25 = vmatpush.msra.mxu0 0.0
  %26 = vmatpush.msra.mxu0 0.0
  %27 = vmatpush.msra.mxu0 0.0
  %28 = vmatpush.msra.mxu0 0.0
  %29 = vmatpush.msra.mxu0 0.0
  %30 = vmatpush.msra.mxu0 0.0
  %31 = vmatpush.msra.mxu0 0.0
  %32 = vmatpush.msra.mxu0 0.0
  %33 = vmatpush.msra.mxu0 0.0
  %34 = vmatpush.msra.mxu0 0.0
  %35 = vmatpush.msra.mxu0 0.0
  %v36 = vand.u32 %v15, 4294901760
  %37 = vmatpush.msra.mxu0 %v36
  %v38 = vand.u32 %v12, 4294901760
  %39 = vmatpush.msra.mxu0 %v38
  %v40 = vand.u32 %v20, 4294901760
  %v41 = vsub.f32 %v20, %v40
  %v42 = vand.u32 %v41, 4294901760
  %v43 = vsub.f32 %v41, %v42
  %v44 = vand.u32 %v43, 4294901760
  %45 = vmatmul.f32.gmra.mxu0 %v44
  %v46 = vpop.f32.mrf.mxu0
  %v47 = vadd.f32 0.0, %v46
  %48 = vdwg.mxu0
  %49 = vmatpush.msra.mxu0 0.0
  %50 = vmatpush.msra.mxu0 0.0
  %51 = vmatpush.msra.mxu0 0.0
  %52 = vmatpush.msra.mxu0 0.0
  %53 = vmatpush.msra.mxu0 0.0
  %54 = vmatpush.msra.mxu0 0.0
  %55 = vmatpush.msra.mxu0 0.0
  %56 = vmatpush.msra.mxu0 0.0
  %57 = vmatpush.msra.mxu0 0.0
  %58 = vmatpush.msra.mxu0 0.0
  %59 = vmatpush.msra.mxu0 0.0
  %60 = vmatpush.msra.mxu0 0.0
  %61 = vmatpush.msra.mxu0 0.0
  %62 = vmatpush.msra.mxu0 0.0
  %v63 = vand.u32 %v15, 4294901760
  %v64 = vsub.f32 %v15, %v63
  %v65 = vand.u32 %v64, 4294901760
  %v66 = vsub.f32 %v64, %v65
  %v67 = vand.u32 %v66, 4294901760
  %68 = vmatpush.msra.mxu0 %v67
  %v69 = vand.u32 %v12, 4294901760
  %v70 = vsub.f32 %v12, %v69
  %v71 = vand.u32 %v70, 4294901760
  %v72 = vsub.f32 %v70, %v71
  %v73 = vand.u32 %v72, 4294901760
  %74 = vmatpush.msra.mxu0 %v73
  %v75 = vand.u32 %v20, 4294901760
  %76 = vmatmul.f32.gmra.mxu0 %v75
  %v77 = vpop.f32.mrf.mxu0
  %v78 = vadd.f32 %v47, %v77
  %79 = vdwg.mxu0
  %80 = vmatpush.msra.mxu0 0.0
  %81 = vmatpush.msra.mxu0 0.0
  %82 = vmatpush.msra.mxu0 0.0
  %83 = vmatpush.msra.mxu0 0.0
  %84 = vmatpush.msra.mxu0 0.0
  %85 = vmatpush.msra.mxu0 0.0
  %86 = vmatpush.msra.mxu0 0.0
  %87 = vmatpush.msra.mxu0 0.0
  %88 = vmatpush.msra.mxu0 0.0
  %89 = vmatpush.msra.mxu0 0.0
  %90 = vmatpush.msra.mxu0 0.0
  %91 = vmatpush.msra.mxu0 0.0
  %92 = vmatpush.msra.mxu0 0.0
  %93 = vmatpush.msra.mxu0 0.0
  %v94 = vand.u32 %v15, 4294901760
  %v95 = vsub.f32 %v15, %v94
  %96 = vmatpush.msra.mxu0 %v95
  %v97 = vand.u32 %v12, 4294901760
  %v98 = vsub.f32 %v12, %v97
  %99 = vmatpush.msra.mxu0 %v98
  %v100 = vand.u32 %v20, 4294901760
  %v101 = vsub.f32 %v20, %v100
  %102 = vmatmul.f32.gmra.mxu0 %v101
  %v103 = vpop.f32.mrf.mxu0
  %v104 = vadd.f32 %v78, %v103
  %105 = vdwg.mxu0
  %106 = vmatpush.msra.mxu0 0.0
  %107 = vmatpush.msra.mxu0 0.0
  %108 = vmatpush.msra.mxu0 0.0
  %109 = vmatpush.msra.mxu0 0.0
  %110 = vmatpush.msra.mxu0 0.0
  %111 = vmatpush.msra.mxu0 0.0
  %112 = vmatpush.msra.mxu0 0.0
  %113 = vmatpush.msra.mxu0 0.0
  %114 = vmatpush.msra.mxu0 0.0
  %115 = vmatpush.msra.mxu0 0.0
  %116 = vmatpush.msra.mxu0 0.0
  %117 = vmatpush.msra.mxu0 0.0
  %118 = vmatpush.msra.mxu0 0.0
  %119 = vmatpush.msra.mxu0 0.0
  %v120 = vand.u32 %v15, 4294901760
  %121 = vmatpush.msra.mxu0 %v120
  %v122 = vand.u32 %v12, 4294901760
  %123 = vmatpush.msra.mxu0 %v122
  %v124 = vand.u32 %v20, 4294901760
  %v125 = vsub.f32 %v20, %v124
  %v126 = vand.u32 %v125, 4294901760
  %127 = vmatmul.f32.gmra.mxu0 %v126
  %v128 = vpop.f32.mrf.mxu0
  %v129 = vadd.f32 %v104, %v128
  %130 = vdwg.mxu0
  %131 = vmatpush.msra.mxu0 0.0
  %132 = vmatpush.msra.mxu0 0.0
  %133 = vmatpush.msra.mxu0 0.0
  %134 = vmatpush.msra.mxu0 0.0
  %135 = vmatpush.msra.mxu0 0.0
  %136 = vmatpush.msra.mxu0 0.0
  %137 = vmatpush.msra.mxu0 0.0
  %138 = vmatpush.msra.mxu0 0.0
  %139 = vmatpush.msra.mxu0 0.0
  %140 = vmatpush.msra.mxu0 0.0
  %141 = vmatpush.msra.mxu0 0.0
  %142 = vmatpush.msra.mxu0 0.0
  %143 = vmatpush.msra.mxu0 0.0
  %144 = vmatpush.msra.mxu0 0.0
  %v145 = vand.u32 %v15, 4294901760
  %v146 = vsub.f32 %v15, %v145
  %v147 = vand.u32 %v146, 4294901760
  %148 = vmatpush.msra.mxu0 %v147
  %v149 = vand.u32 %v12, 4294901760
  %v150 = vsub.f32 %v12, %v149
  %v151 = vand.u32 %v150, 4294901760
  %152 = vmatpush.msra.mxu0 %v151
  %v153 = vand.u32 %v20, 4294901760
  %154 = vmatmul.f32.gmra.mxu0 %v153
  %v155 = vpop.f32.mrf.mxu0
  %v156 = vadd.f32 %v129, %v155
  %157 = vdwg.mxu0
  %158 = vmatpush.msra.mxu0 0.0
  %159 = vmatpush.msra.mxu0 0.0
  %160 = vmatpush.msra.mxu0 0.0
  %161 = vmatpush.msra.mxu0 0.0
  %162 = vmatpush.msra.mxu0 0.0
  %163 = vmatpush.msra.mxu0 0.0
  %164 = vmatpush.msra.mxu0 0.0
  %165 = vmatpush.msra.mxu0 0.0
  %166 = vmatpush.msra.mxu0 0.0
  %167 = vmatpush.msra.mxu0 0.0
  %168 = vmatpush.msra.mxu0 0.0
  %169 = vmatpush.msra.mxu0 0.0
  %170 = vmatpush.msra.mxu0 0.0
  %171 = vmatpush.msra.mxu0 0.0
  %v172 = vand.u32 %v15, 4294901760
  %173 = vmatpush.msra.mxu0 %v172
  %v174 = vand.u32 %v12, 4294901760
  %175 = vmatpush.msra.mxu0 %v174
  %v176 = vand.u32 %v20, 4294901760
  %177 = vmatmul.f32.gmra.mxu0 %v176
  %v178 = vpop.f32.mrf.mxu0
  %v179 = vadd.f32 %v156, %v178
  %180 = vdwg.mxu0
  %181 = vmatpush.msra.mxu0 0.0
  %182 = vmatpush.msra.mxu0 0.0
  %183 = vmatpush.msra.mxu0 0.0
  %184 = vmatpush.msra.mxu0 0.0
  %185 = vmatpush.msra.mxu0 0.0
  %186 = vmatpush.msra.mxu0 0.0
  %187 = vmatpush.msra.mxu0 0.0
  %188 = vmatpush.msra.mxu0 0.0
  %189 = vmatpush.msra.mxu0 0.0
  %190 = vmatpush.msra.mxu0 0.0
  %191 = vmatpush.msra.mxu0 0.0
  %192 = vmatpush.msra.mxu0 0.0
  %193 = vmatpush.msra.mxu0 0.0
  %194 = vmatpush.msra.mxu0 0.0
  %v195 = vand.u32 %v16, 4294901760
  %196 = vmatpush.msra.mxu0 %v195
  %v197 = vand.u32 %v13, 4294901760
  %198 = vmatpush.msra.mxu0 %v197
  %v199 = vand.u32 %v20, 4294901760
  %v200 = vsub.f32 %v20, %v199
  %v201 = vand.u32 %v200, 4294901760
  %v202 = vsub.f32 %v200, %v201
  %v203 = vand.u32 %v202, 4294901760
  %204 = vmatmul.f32.gmra.mxu0 %v203
  %v205 = vpop.f32.mrf.mxu0
  %v206 = vadd.f32 0.0, %v205
  %207 = vdwg.mxu0
  %208 = vmatpush.msra.mxu0 0.0
  %209 = vmatpush.msra.mxu0 0.0
  %210 = vmatpush.msra.mxu0 0.0
  %211 = vmatpush.msra.mxu0 0.0
  %212 = vmatpush.msra.mxu0 0.0
  %213 = vmatpush.msra.mxu0 0.0
  %214 = vmatpush.msra.mxu0 0.0
  %215 = vmatpush.msra.mxu0 0.0
  %216 = vmatpush.msra.mxu0 0.0
  %217 = vmatpush.msra.mxu0 0.0
  %218 = vmatpush.msra.mxu0 0.0
  %219 = vmatpush.msra.mxu0 0.0
  %220 = vmatpush.msra.mxu0 0.0
  %221 = vmatpush.msra.mxu0 0.0
  %v222 = vand.u32 %v16, 4294901760
  %v223 = vsub.f32 %v16, %v222
  %v224 = vand.u32 %v223, 4294901760
  %v225 = vsub.f32 %v223, %v224
  %v226 = vand.u32 %v225, 4294901760
  %227 = vmatpush.msra.mxu0 %v226
  %v228 = vand.u32 %v13, 4294901760
  %v229 = vsub.f32 %v13, %v228
  %v230 = vand.u32 %v229, 4294901760
  %v231 = vsub.f32 %v229, %v230
  %v232 = vand.u32 %v231, 4294901760
  %233 = vmatpush.msra.mxu0 %v232
  %v234 = vand.u32 %v20, 4294901760
  %235 = vmatmul.f32.gmra.mxu0 %v234
  %v236 = vpop.f32.mrf.mxu0
  %v237 = vadd.f32 %v206, %v236
  %238 = vdwg.mxu0
  %239 = vmatpush.msra.mxu0 0.0
  %240 = vmatpush.msra.mxu0 0.0
  %241 = vmatpush.msra.mxu0 0.0
  %242 = vmatpush.msra.mxu0 0.0
  %243 = vmatpush.msra.mxu0 0.0
  %244 = vmatpush.msra.mxu0 0.0
  %245 = vmatpush.msra.mxu0 0.0
  %246 = vmatpush.msra.mxu0 0.0
  %247 = vmatpush.msra.mxu0 0.0
  %248 = vmatpush.msra.mxu0 0.0
  %249 = vmatpush.msra.mxu0 0.0
  %250 = vmatpush.msra.mxu0 0.0
  %251 = vmatpush.msra.mxu0 0.0
  %252 = vmatpush.msra.mxu0 0.0
  %v253 = vand.u32 %v16, 4294901760
  %v254 = vsub.f32 %v16, %v253
  %255 = vmatpush.msra.mxu0 %v254
  %v256 = vand.u32 %v13, 4294901760
  %v257 = vsub.f32 %v13, %v256
  %258 = vmatpush.msra.mxu0 %v257
  %v259 = vand.u32 %v20, 4294901760
  %v260 = vsub.f32 %v20, %v259
  %261 = vmatmul.f32.gmra.mxu0 %v260
  %v262 = vpop.f32.mrf.mxu0
  %v263 = vadd.f32 %v237, %v262
  %264 = vdwg.mxu0
  %265 = vmatpush.msra.mxu0 0.0
  %266 = vmatpush.msra.mxu0 0.0
  %267 = vmatpush.msra.mxu0 0.0
  %268 = vmatpush.msra.mxu0 0.0
  %269 = vmatpush.msra.mxu0 0.0
  %270 = vmatpush.msra.mxu0 0.0
  %271 = vmatpush.msra.mxu0 0.0
  %272 = vmatpush.msra.mxu0 0.0
  %273 = vmatpush.msra.mxu0 0.0
  %274 = vmatpush.msra.mxu0 0.0
  %275 = vmatpush.msra.mxu0 0.0
  %276 = vmatpush.msra.mxu0 0.0
  %277 = vmatpush.msra.mxu0 0.0
  %278 = vmatpush.msra.mxu0 0.0
  %v279 = vand.u32 %v16, 4294901760
  %280 = vmatpush.msra.mxu0 %v279
  %v281 = vand.u32 %v13, 4294901760
  %282 = vmatpush.msra.mxu0 %v281
  %v283 = vand.u32 %v20, 4294901760
  %v284 = vsub.f32 %v20, %v283
  %v285 = vand.u32 %v284, 4294901760
  %286 = vmatmul.f32.gmra.mxu0 %v285
  %v287 = vpop.f32.mrf.mxu0
  %v288 = vadd.f32 %v263, %v287
  %289 = vdwg.mxu0
  %290 = vmatpush.msra.mxu0 0.0
  %291 = vmatpush.msra.mxu0 0.0
  %292 = vmatpush.msra.mxu0 0.0
  %293 = vmatpush.msra.mxu0 0.0
  %294 = vmatpush.msra.mxu0 0.0
  %295 = vmatpush.msra.mxu0 0.0
  %296 = vmatpush.msra.mxu0 0.0
  %297 = vmatpush.msra.mxu0 0.0
  %298 = vmatpush.msra.mxu0 0.0
  %299 = vmatpush.msra.mxu0 0.0
  %300 = vmatpush.msra.mxu0 0.0
  %301 = vmatpush.msra.mxu0 0.0
  %302 = vmatpush.msra.mxu0 0.0
  %303 = vmatpush.msra.mxu0 0.0
  %v304 = vand.u32 %v16, 4294901760
  %v305 = vsub.f32 %v16, %v304
  %v306 = vand.u32 %v305, 4294901760
  %307 = vmatpush.msra.mxu0 %v306
  %v308 = vand.u32 %v13, 4294901760
  %v309 = vsub.f32 %v13, %v308
  %v310 = vand.u32 %v309, 4294901760
  %311 = vmatpush.msra.mxu0 %v310
  %v312 = vand.u32 %v20, 4294901760
  %313 = vmatmul.f32.gmra.mxu0 %v312
  %v314 = vpop.f32.mrf.mxu0
  %v315 = vadd.f32 %v288, %v314
  %316 = vdwg.mxu0
  %317 = vmatpush.msra.mxu0 0.0
  %318 = vmatpush.msra.mxu0 0.0
  %319 = vmatpush.msra.mxu0 0.0
  %320 = vmatpush.msra.mxu0 0.0
  %321 = vmatpush.msra.mxu0 0.0
  %322 = vmatpush.msra.mxu0 0.0
  %323 = vmatpush.msra.mxu0 0.0
  %324 = vmatpush.msra.mxu0 0.0
  %325 = vmatpush.msra.mxu0 0.0
  %326 = vmatpush.msra.mxu0 0.0
  %327 = vmatpush.msra.mxu0 0.0
  %328 = vmatpush.msra.mxu0 0.0
  %329 = vmatpush.msra.mxu0 0.0
  %330 = vmatpush.msra.mxu0 0.0
  %v331 = vand.u32 %v16, 4294901760
  %332 = vmatpush.msra.mxu0 %v331
  %v333 = vand.u32 %v13, 4294901760
  %334 = vmatpush.msra.mxu0 %v333
  %v335 = vand.u32 %v20, 4294901760
  %336 = vmatmul.f32.gmra.mxu0 %v335
  %v337 = vpop.f32.mrf.mxu0
  %v338 = vadd.f32 %v315, %v337
  %339 = vdwg.mxu0
  %340 = vmatpush.msra.mxu0 0.0
  %341 = vmatpush.msra.mxu0 0.0
  %342 = vmatpush.msra.mxu0 0.0
  %343 = vmatpush.msra.mxu0 0.0
  %344 = vmatpush.msra.mxu0 0.0
  %345 = vmatpush.msra.mxu0 0.0
  %346 = vmatpush.msra.mxu0 0.0
  %347 = vmatpush.msra.mxu0 0.0
  %348 = vmatpush.msra.mxu0 0.0
  %349 = vmatpush.msra.mxu0 0.0
  %350 = vmatpush.msra.mxu0 0.0
  %351 = vmatpush.msra.mxu0 0.0
  %352 = vmatpush.msra.mxu0 0.0
  %353 = vmatpush.msra.mxu0 0.0
  %v354 = vand.u32 %v17, 4294901760
  %355 = vmatpush.msra.mxu0 %v354
  %v356 = vand.u32 %v14, 4294901760
  %357 = vmatpush.msra.mxu0 %v356
  %v358 = vand.u32 %v20, 4294901760
  %v359 = vsub.f32 %v20, %v358
  %v360 = vand.u32 %v359, 4294901760
  %v361 = vsub.f32 %v359, %v360
  %v362 = vand.u32 %v361, 4294901760
  %363 = vmatmul.f32.gmra.mxu0 %v362
  %v364 = vpop.f32.mrf.mxu0
  %v365 = vadd.f32 0.0, %v364
  %366 = vdwg.mxu0
  %367 = vmatpush.msra.mxu0 0.0
  %368 = vmatpush.msra.mxu0 0.0
  %369 = vmatpush.msra.mxu0 0.0
  %370 = vmatpush.msra.mxu0 0.0
  %371 = vmatpush.msra.mxu0 0.0
  %372 = vmatpush.msra.mxu0 0.0
  %373 = vmatpush.msra.mxu0 0.0
  %374 = vmatpush.msra.mxu0 0.0
  %375 = vmatpush.msra.mxu0 0.0
  %376 = vmatpush.msra.mxu0 0.0
  %377 = vmatpush.msra.mxu0 0.0
  %378 = vmatpush.msra.mxu0 0.0
  %379 = vmatpush.msra.mxu0 0.0
  %380 = vmatpush.msra.mxu0 0.0
  %v381 = vand.u32 %v17, 4294901760
  %v382 = vsub.f32 %v17, %v381
  %v383 = vand.u32 %v382, 4294901760
  %v384 = vsub.f32 %v382, %v383
  %v385 = vand.u32 %v384, 4294901760
  %386 = vmatpush.msra.mxu0 %v385
  %v387 = vand.u32 %v14, 4294901760
  %v388 = vsub.f32 %v14, %v387
  %v389 = vand.u32 %v388, 4294901760
  %v390 = vsub.f32 %v388, %v389
  %v391 = vand.u32 %v390, 4294901760
  %392 = vmatpush.msra.mxu0 %v391
  %v393 = vand.u32 %v20, 4294901760
  %394 = vmatmul.f32.gmra.mxu0 %v393
  %v395 = vpop.f32.mrf.mxu0
  %v396 = vadd.f32 %v365, %v395
  %397 = vdwg.mxu0
  %398 = vmatpush.msra.mxu0 0.0
  %399 = vmatpush.msra.mxu0 0.0
  %400 = vmatpush.msra.mxu0 0.0
  %401 = vmatpush.msra.mxu0 0.0
  %402 = vmatpush.msra.mxu0 0.0
  %403 = vmatpush.msra.mxu0 0.0
  %404 = vmatpush.msra.mxu0 0.0
  %405 = vmatpush.msra.mxu0 0.0
  %406 = vmatpush.msra.mxu0 0.0
  %407 = vmatpush.msra.mxu0 0.0
  %408 = vmatpush.msra.mxu0 0.0
  %409 = vmatpush.msra.mxu0 0.0
  %410 = vmatpush.msra.mxu0 0.0
  %411 = vmatpush.msra.mxu0 0.0
  %v412 = vand.u32 %v17, 4294901760
  %v413 = vsub.f32 %v17, %v412
  %414 = vmatpush.msra.mxu0 %v413
  %v415 = vand.u32 %v14, 4294901760
  %v416 = vsub.f32 %v14, %v415
  %417 = vmatpush.msra.mxu0 %v416
  %v418 = vand.u32 %v20, 4294901760
  %v419 = vsub.f32 %v20, %v418
  %420 = vmatmul.f32.gmra.mxu0 %v419
  %v421 = vpop.f32.mrf.mxu0
  %v422 = vadd.f32 %v396, %v421
  %423 = vdwg.mxu0
  %424 = vmatpush.msra.mxu0 0.0
  %425 = vmatpush.msra.mxu0 0.0
  %426 = vmatpush.msra.mxu0 0.0
  %427 = vmatpush.msra.mxu0 0.0
  %428 = vmatpush.msra.mxu0 0.0
  %429 = vmatpush.msra.mxu0 0.0
  %430 = vmatpush.msra.mxu0 0.0
  %431 = vmatpush.msra.mxu0 0.0
  %432 = vmatpush.msra.mxu0 0.0
  %433 = vmatpush.msra.mxu0 0.0
  %434 = vmatpush.msra.mxu0 0.0
  %435 = vmatpush.msra.mxu0 0.0
  %436 = vmatpush.msra.mxu0 0.0
  %437 = vmatpush.msra.mxu0 0.0
  %v438 = vand.u32 %v17, 4294901760
  %439 = vmatpush.msra.mxu0 %v438
  %v440 = vand.u32 %v14, 4294901760
  %441 = vmatpush.msra.mxu0 %v440
  %v442 = vand.u32 %v20, 4294901760
  %v443 = vsub.f32 %v20, %v442
  %v444 = vand.u32 %v443, 4294901760
  %445 = vmatmul.f32.gmra.mxu0 %v444
  %v446 = vpop.f32.mrf.mxu0
  %v447 = vadd.f32 %v422, %v446
  %448 = vdwg.mxu0
  %449 = vmatpush.msra.mxu0 0.0
  %450 = vmatpush.msra.mxu0 0.0
  %451 = vmatpush.msra.mxu0 0.0
  %452 = vmatpush.msra.mxu0 0.0
  %453 = vmatpush.msra.mxu0 0.0
  %454 = vmatpush.msra.mxu0 0.0
  %455 = vmatpush.msra.mxu0 0.0
  %456 = vmatpush.msra.mxu0 0.0
  %457 = vmatpush.msra.mxu0 0.0
  %458 = vmatpush.msra.mxu0 0.0
  %459 = vmatpush.msra.mxu0 0.0
  %460 = vmatpush.msra.mxu0 0.0
  %461 = vmatpush.msra.mxu0 0.0
  %462 = vmatpush.msra.mxu0 0.0
  %v463 = vand.u32 %v17, 4294901760
  %v464 = vsub.f32 %v17, %v463
  %v465 = vand.u32 %v464, 4294901760
  %466 = vmatpush.msra.mxu0 %v465
  %v467 = vand.u32 %v14, 4294901760
  %v468 = vsub.f32 %v14, %v467
  %v469 = vand.u32 %v468, 4294901760
  %470 = vmatpush.msra.mxu0 %v469
  %v471 = vand.u32 %v20, 4294901760
  %472 = vmatmul.f32.gmra.mxu0 %v471
  %v473 = vpop.f32.mrf.mxu0
  %v474 = vadd.f32 %v447, %v473
  %475 = vdwg.mxu0
  %476 = vmatpush.msra.mxu0 0.0
  %477 = vmatpush.msra.mxu0 0.0
  %478 = vmatpush.msra.mxu0 0.0
  %479 = vmatpush.msra.mxu0 0.0
  %480 = vmatpush.msra.mxu0 0.0
  %481 = vmatpush.msra.mxu0 0.0
  %482 = vmatpush.msra.mxu0 0.0
  %483 = vmatpush.msra.mxu0 0.0
  %484 = vmatpush.msra.mxu0 0.0
  %485 = vmatpush.msra.mxu0 0.0
  %486 = vmatpush.msra.mxu0 0.0
  %487 = vmatpush.msra.mxu0 0.0
  %488 = vmatpush.msra.mxu0 0.0
  %489 = vmatpush.msra.mxu0 0.0
  %v490 = vand.u32 %v17, 4294901760
  %491 = vmatpush.msra.mxu0 %v490
  %v492 = vand.u32 %v14, 4294901760
  %493 = vmatpush.msra.mxu0 %v492
  %v494 = vand.u32 %v20, 4294901760
  %495 = vmatmul.f32.gmra.mxu0 %v494
  %v496 = vpop.f32.mrf.mxu0
  %v497 = vadd.f32 %v474, %v496
  %498 = vdwg.mxu0
  %v499 = vmax.f32 %v179, 0.0
  %v500 = vmax.f32 %v338, 0.0
  %v501 = vmax.f32 %v497, 0.0
  %v502 = vadd.f32 %v499, %v500
  %v503 = vadd.f32 %v502, %v501
  %504 = vadd.xlane.f32.xlu0 %v503
  %v505 = vpop.xlane.xlu0 %504
  %v506 = vmul.f32 %v499, %v499
  %v507 = vmul.f32 %v500, %v500
  %v508 = vmul.f32 %v501, %v501
  %v509 = vadd.f32 %v506, %v507
  %v510 = vadd.f32 %v509, %v508
  %511 = vadd.xlane.f32.xlu0 %v510
  %v512 = vpop.xlane.xlu0 %511
  %v513 = vmul.f32 %v505, 0.0030864198
  %v514 = vmul.f32 %v512, 0.0030864198
  %v515 = vmul.f32 %v513, %v513
  %v516 = vsub.f32 %v514, %v515
  %v517 = vadd.f32 %v516, 1e-05
  %v518 = vrsqrt.pop %v517
  %v519 = vmul.f32 %v518, %v517
  %v520 = vmul.f32 %v519, %v518
  %v521 = vmul.f32 0.5, %v520
  %v522 = vsub.f32 1.5, %v521
  %v523 = vmul.f32 %v518, %v522
  %vm524 = vweird.f32 %v517
  %vm525 = vweird.f32 %v518
  %vm526 = vmor %vm524, %vm525
  %v527 = vsel %vm526, %v518, %v523
  %v528 = vsub.f32 %v499, %v513
  %v529 = vsub.f32 %v500, %v513
  %v530 = vsub.f32 %v501, %v513
  %v531 = vmul.f32 %v527, %v11
  %533 = vset.pattern.permute.xlu0 12
  %534 = vperm.xlu0 %533, %v531
  %v535 = vpop.permute.xlu0 %534
  %v537 = vmul.f32 %v528, %v535
  %v538 = vmul.f32 %v529, %v535
  %v539 = vmul.f32 %v530, %v535
  %540 = vset.pattern.permute.xlu0 13
  %541 = vperm.xlu0 %540, %v11
  %v542 = vpop.permute.xlu0 %541
  %v544 = vadd.f32 %v537, %v542
  %v545 = vadd.f32 %v538, %v542
  %v546 = vadd.f32 %v539, %v542
  %v547 = vmax.f32 %v544, 0.0
  %v548 = vmax.f32 %v545, 0.0
  %v549 = vmax.f32 %v546, 0.0
  %v550 = vmin.f32 %v547, 20.0
  %v551 = vmin.f32 %v548, 20.0
  %v552 = vmin.f32 %v549, 20.0
  %v553 = vmul.f32 %v550, 1.442695
  %v554 = vpow.pop %v553
  %v555 = vmul.f32 %v551, 1.442695
  %v556 = vpow.pop %v555
  %v557 = vmul.f32 %v552, 1.442695
  %v558 = vpow.pop %v557
  %v559 = vadd.f32 %v554, 1.0
  %v560 = vadd.f32 %v556, 1.0
  %v561 = vadd.f32 %v558, 1.0
  %v562 = vmul.f32 %v547, %v559
  %v563 = vmul.f32 %v548, %v560
  %v564 = vmul.f32 %v549, %v561
  %v565 = vadd.f32 %v554, 2.0
  %v566 = vadd.f32 %v556, 2.0
  %v567 = vadd.f32 %v558, 2.0
  %v568 = vrcp.pop %v565
  %v569 = vmul.f32 %v565, %v568
  %v570 = vsub.f32 1.0, %v569
  %v571 = vmul.f32 %v568, %v570
  %v572 = vadd.f32 %v568, %v571
  %vm573 = vweird.f32 %v565
  %vm574 = vweird.f32 %v568
  %vm575 = vmor %vm573, %vm574
  %v576 = vsel %vm575, %v568, %v572
  %v577 = vand.u32 2147483647, %v565
  %vm578 = vcmp.eq.f32.partialorder %v577, 8.507059e+37
  %v579 = vand.u32 %v565, 2147483648
  %v580 = vor.u32 1.1754944e-38, %v579
  %v581 = vsel %vm578, %v580, %v576
  %v582 = vmul.f32 %v562, %v581
  %v583 = vrcp.pop %v566
  %v584 = vmul.f32 %v566, %v583
  %v585 = vsub.f32 1.0, %v584
  %v586 = vmul.f32 %v583, %v585
  %v587 = vadd.f32 %v583, %v586
  %vm588 = vweird.f32 %v566
  %vm589 = vweird.f32 %v583
  %vm590 = vmor %vm588, %vm589
  %v591 = vsel %vm590, %v583, %v587
  %v592 = vand.u32 2147483647, %v566
  %vm593 = vcmp.eq.f32.partialorder %v592, 8.507059e+37
  %v594 = vand.u32 %v566, 2147483648
  %v595 = vor.u32 1.1754944e-38, %v594
  %v596 = vsel %vm593, %v595, %v591
  %v597 = vmul.f32 %v563, %v596
  %v598 = vrcp.pop %v567
  %v599 = vmul.f32 %v567, %v598
  %v600 = vsub.f32 1.0, %v599
  %v601 = vmul.f32 %v598, %v600
  %v602 = vadd.f32 %v598, %v601
  %vm603 = vweird.f32 %v567
  %vm604 = vweird.f32 %v598
  %vm605 = vmor %vm603, %vm604
  %v606 = vsel %vm605, %v598, %v602
  %v607 = vand.u32 2147483647, %v567
  %vm608 = vcmp.eq.f32.partialorder %v607, 8.507059e+37
  %v609 = vand.u32 %v567, 2147483648
  %v610 = vor.u32 1.1754944e-38, %v609
  %v611 = vsel %vm608, %v610, %v606
  %v612 = vmul.f32 %v564, %v611
  %v613 = vadd.f32 %v582, 1.0
  %v614 = vadd.f32 %v597, 1.0
  %v615 = vadd.f32 %v612, 1.0
  %616 = vst [vmem:[%s2] sm:$0xff] %v613
  %617 = vst [vmem:[%s2 + $0x8] sm:$0xff] %v614
  %618 = vst [vmem:[%s2 + $0x10] sm:$0xff] %v615
  // Predicated region
  $region10: #{model_forward.1} parent=0 // pred_check
    _
  $region11: #{model_forward.1} parent=0 // pred_check_branch
    %620 = sbr.rel (0) target = $region13
  $region12: #{model_forward.1} parent=0 // pred_region
    _
  $region13: #{model_forward.1} parent=0 // pred_fallthru
    _
  // Predicated region
  $region14: #{model_forward.1} parent=0 // pred_check
    _
  $region15: #{model_forward.1} parent=0 // pred_check_branch
    %622 = sbr.rel (0) target = $region17
  $region16: #{model_forward.1} parent=0 // pred_region
    _
  $region17: #{model_forward.1} parent=0 // pred_fallthru
    _

</llo_original>
